<compile_context>
chip_gen: v7x
topology: tpu7x:2x2x1
jax: 0.10.0
libtpu: 0.0.40
codegen_flags: <defaults>
</compile_context>

<pallas_src>
import jax
import jax.numpy as jnp
from jax.experimental import pallas as pl
from jax.experimental.pallas import tpu as pltpu

K_IN = 202            # input feature count (matches torch.nn.Linear(202, 128))
H1, H2, H3 = 128, 64, 32


def densenet_kernel(x_ref,
                    w1_ref, b1_ref,
                    w2_ref, b2_ref,
                    w3_ref, b3_ref,
                    w4_ref, b4_ref,
                    o_ref):
    # In-kernel cast to bf16 (free on the VPU; no-op if the caller already passes bf16).
    x = x_ref[...].astype(jnp.bfloat16)                                   # (TB, 202)

    # Layer 1: (TB, 202) @ (202, 128) with fp32 MXU accumulation (Mosaic pads K lanes).
    h = jnp.dot(x, w1_ref[...], preferred_element_type=jnp.float32)
    h = jnp.maximum(h + b1_ref[...], 0.0).astype(jnp.bfloat16)            # (TB, 128)

    # Layer 2
    h = jnp.dot(h, w2_ref[...], preferred_element_type=jnp.float32)
    h = jnp.maximum(h + b2_ref[...], 0.0).astype(jnp.bfloat16)            # (TB, 64)

    # Layer 3
    h = jnp.dot(h, w3_ref[...], preferred_element_type=jnp.float32)
    h = jnp.maximum(h + b3_ref[...], 0.0)                                 # (TB, 32) fp32

    # Layer 4 (out_features = 1): contract the 32 features against the (1, 32)
    # weight row, producing a lane-dense (1, TB) result block.
    y = jax.lax.dot_general(w4_ref[...], h,
                            dimension_numbers=(((1,), (1,)), ((), ())),
                            preferred_element_type=jnp.float32)           # (1, TB)
    o_ref[...] = (y + b4_ref[...]).astype(o_ref.dtype)


def _round_up(n, m):
    return ((n + m - 1) // m) * m


def prepare_params(params):
    """One-time weight preprocessing (hoisted out of the hot path).

    Input params: w_i stored as [in, out] fp32, b_i as (1, out) fp32.
    """
    return {
        "w1": params["w1"].astype(jnp.bfloat16),           # (202, 128)
        "w2": params["w2"].astype(jnp.bfloat16),           # (128, 64)
        "w3": params["w3"].astype(jnp.bfloat16),           # (64, 32)
        "w4": params["w4"].reshape(1, H3).astype(jnp.float32),   # (1, 32) fp32 (final layer)
        "b1": params["b1"].reshape(1, H1).astype(jnp.float32),
        "b2": params["b2"].reshape(1, H2).astype(jnp.float32),
        "b3": params["b3"].reshape(1, H3).astype(jnp.float32),
        "b4": params["b4"].reshape(1, 1).astype(jnp.float32),
    }


def densenet_forward(x, p, tb=4096):
    """x: (B, 202) float32 (or bfloat16). p: output of prepare_params()."""
    B, K = x.shape
    assert K == K_IN, x.shape

    # Batch tile: multiple of 128 rows, capped at `tb`, and chosen so that
    # num_tiles >= 2 whenever B > 128 (keeps both v7x TensorCores busy).
    TB = min(tb, _round_up(pl.cdiv(B, 2), 128))
    num_tiles = pl.cdiv(B, TB)           # ragged last tile; garbage rows sliced off below
    B_cover = num_tiles * TB

    def resident(shape):
        # Weights/biases: same (full-array) block every grid step -> stay VMEM-resident.
        return pl.BlockSpec(shape, lambda i: (0, 0))

    weight_bytes = sum(int(v.size) * v.dtype.itemsize for v in p.values())
    flops = 2 * B_cover * (K_IN * H1 + H1 * H2 + H2 * H3 + H3)
    bytes_accessed = int(x.size) * x.dtype.itemsize + weight_bytes + B_cover * 4

    out = pl.pallas_call(
        densenet_kernel,
        out_shape=jax.ShapeDtypeStruct((1, B_cover), jnp.float32),
        grid=(num_tiles,),
        in_specs=[
            # x streamed per batch tile in its native layout (last block dim == full dim).
            pl.BlockSpec((TB, K_IN), lambda i: (i, 0)),
            resident((K_IN, H1)), resident((1, H1)),       # w1, b1
            resident((H1, H2)),   resident((1, H2)),       # w2, b2
            resident((H2, H3)),   resident((1, H3)),       # w3, b3
            resident((1, H3)),    resident((1, 1)),        # w4 (row), b4
        ],
        # Lane-dense output: each grid step writes a contiguous (1, TB) slab.
        out_specs=pl.BlockSpec((1, TB), lambda i: (0, i)),
        compiler_params=pltpu.CompilerParams(
            dimension_semantics=("parallel",),
            vmem_limit_bytes=48 << 20),
        cost_estimate=pl.CostEstimate(
            flops=flops, transcendentals=0, bytes_accessed=bytes_accessed),
    )(x, p["w1"], p["b1"], p["w2"], p["b2"], p["w3"], p["b3"], p["w4"], p["b4"])

    # Rows >= B of the tail tile were computed from stale VMEM and are discarded here.
    return out[0, :B][:, None]


def init_params(key):
    """Deterministic init mimicking torch.nn.Linear default U(-1/sqrt(fan_in), +)."""
    sizes = [(K_IN, H1), (H1, H2), (H2, H3), (H3, 1)]
    params = {}
    for i, (fan_in, fan_out) in enumerate(sizes, start=1):
        key, kw, kb = jax.random.split(key, 3)
        bound = 1.0 / jnp.sqrt(jnp.float32(fan_in))
        # stored as [in, out] so the kernel computes x @ W (same math as torch's x @ W.T)
        params[f"w{i}"] = jax.random.uniform(kw, (fan_in, fan_out), jnp.float32,
                                             minval=-bound, maxval=bound)
        params[f"b{i}"] = jax.random.uniform(kb, (1, fan_out), jnp.float32,
                                             minval=-bound, maxval=bound)
    return params


def reference_forward(x, params):
    h = x
    for i in range(1, 5):
        h = h @ params[f"w{i}"] + params[f"b{i}"]
        if i < 4:
            h = jnp.maximum(h, 0.0)
    return h


if __name__ == "__main__":
    key = jax.random.PRNGKey(0)
    kx, kp = jax.random.split(key)

    B = 8
    x = jax.random.normal(kx, (B, K_IN), jnp.float32)
    params = init_params(kp)
    prepared = prepare_params(params)     # one-time weight cast/reshape (outside hot path)

    fwd = jax.jit(densenet_forward)
    out = jax.block_until_ready(fwd(x, prepared))

    ref = reference_forward(x, params)
    assert out.shape == (B, 1), out.shape
    # bf16 inputs/weights (fp32 accumulation) -> relaxed tolerance vs fp32 reference.
    assert jnp.allclose(out, ref, atol=2e-2, rtol=2e-2), (
        f"mismatch vs reference: max abs err {jnp.max(jnp.abs(out - ref))}")

    print("KERNEL_OK")
</pallas_src>

<mosaic_0001>
module attributes {stable_mosaic.version = 11 : i64} {
  func.func @densenet_kernel(%arg0: i32, %arg1: memref<128x202xf32, #tpu.memory_space<vmem>>, %arg2: memref<202x128xbf16, #tpu.memory_space<vmem>>, %arg3: memref<1x128xf32, #tpu.memory_space<vmem>>, %arg4: memref<128x64xbf16, #tpu.memory_space<vmem>>, %arg5: memref<1x64xf32, #tpu.memory_space<vmem>>, %arg6: memref<64x32xbf16, #tpu.memory_space<vmem>>, %arg7: memref<1x32xf32, #tpu.memory_space<vmem>>, %arg8: memref<1x32xf32, #tpu.memory_space<vmem>>, %arg9: memref<1x1xf32, #tpu.memory_space<vmem>>, %arg10: memref<1x128xf32, #tpu.memory_space<vmem>>) attributes {dimension_semantics = [#tpu.dimension_semantics<parallel>], iteration_bounds = array<i64: 1>, scalar_prefetch = 0 : i64, scratch_operands = 0 : i64, tpu.core_type = #tpu.core_type<tc>, window_params = [{transform_indices = @transform_0, window_bounds = array<i64: 128, 202>}, {pipeline_mode = #tpu.pipeline_mode<synchronous>, transform_indices = @transform_1, window_bounds = array<i64: 202, 128>}, {pipeline_mode = #tpu.pipeline_mode<synchronous>, transform_indices = @transform_2, window_bounds = array<i64: 1, 128>}, {pipeline_mode = #tpu.pipeline_mode<synchronous>, transform_indices = @transform_3, window_bounds = array<i64: 128, 64>}, {pipeline_mode = #tpu.pipeline_mode<synchronous>, transform_indices = @transform_4, window_bounds = array<i64: 1, 64>}, {pipeline_mode = #tpu.pipeline_mode<synchronous>, transform_indices = @transform_5, window_bounds = array<i64: 64, 32>}, {pipeline_mode = #tpu.pipeline_mode<synchronous>, transform_indices = @transform_6, window_bounds = array<i64: 1, 32>}, {pipeline_mode = #tpu.pipeline_mode<synchronous>, transform_indices = @transform_7, window_bounds = array<i64: 1, 32>}, {pipeline_mode = #tpu.pipeline_mode<synchronous>, transform_indices = @transform_8, window_bounds = array<i64: 1, 1>}, {transform_indices = @transform_9, window_bounds = array<i64: 1, 128>}]} {
    %c0 = arith.constant 0 : index
    %c0_0 = arith.constant 0 : index
    %0 = vector.load %arg1[%c0, %c0_0] : memref<128x202xf32, #tpu.memory_space<vmem>>, vector<128x202xf32>
    %1 = arith.truncf %0 : vector<128x202xf32> to vector<128x202xbf16>
    %c0_1 = arith.constant 0 : index
    %c0_2 = arith.constant 0 : index
    %2 = vector.load %arg2[%c0_1, %c0_2] : memref<202x128xbf16, #tpu.memory_space<vmem>>, vector<202x128xbf16>
    %cst = arith.constant dense<0.000000e+00> : vector<128x128xf32>
    %3 = tpu.matmul %1, %2, %cst {dimension_numbers = #tpu.dot_dimension_numbers<[1], [0], [0], [1], [0, 0, 1, 1], [], []>} : vector<128x202xbf16>, vector<202x128xbf16>, vector<128x128xf32> -> vector<128x128xf32>
    %c0_3 = arith.constant 0 : index
    %c0_4 = arith.constant 0 : index
    %4 = vector.load %arg3[%c0_3, %c0_4] : memref<1x128xf32, #tpu.memory_space<vmem>>, vector<1x128xf32>
    %5 = vector.broadcast %4 : vector<1x128xf32> to vector<128x128xf32>
    %6 = arith.addf %3, %5 : vector<128x128xf32>
    %cst_5 = arith.constant 0.000000e+00 : f32
    %7 = vector.broadcast %cst_5 : f32 to vector<128x128xf32>
    %8 = arith.maximumf %6, %7 : vector<128x128xf32>
    %9 = arith.truncf %8 : vector<128x128xf32> to vector<128x128xbf16>
    %c0_6 = arith.constant 0 : index
    %c0_7 = arith.constant 0 : index
    %10 = vector.load %arg4[%c0_6, %c0_7] : memref<128x64xbf16, #tpu.memory_space<vmem>>, vector<128x64xbf16>
    %cst_8 = arith.constant dense<0.000000e+00> : vector<128x64xf32>
    %11 = tpu.matmul %9, %10, %cst_8 {dimension_numbers = #tpu.dot_dimension_numbers<[1], [0], [0], [1], [0, 0, 1, 1], [], []>} : vector<128x128xbf16>, vector<128x64xbf16>, vector<128x64xf32> -> vector<128x64xf32>
    %c0_9 = arith.constant 0 : index
    %c0_10 = arith.constant 0 : index
    %12 = vector.load %arg5[%c0_9, %c0_10] : memref<1x64xf32, #tpu.memory_space<vmem>>, vector<1x64xf32>
    %13 = vector.broadcast %12 : vector<1x64xf32> to vector<128x64xf32>
    %14 = arith.addf %11, %13 : vector<128x64xf32>
    %cst_11 = arith.constant 0.000000e+00 : f32
    %15 = vector.broadcast %cst_11 : f32 to vector<128x64xf32>
    %16 = arith.maximumf %14, %15 : vector<128x64xf32>
    %17 = arith.truncf %16 : vector<128x64xf32> to vector<128x64xbf16>
    %c0_12 = arith.constant 0 : index
    %c0_13 = arith.constant 0 : index
    %18 = vector.load %arg6[%c0_12, %c0_13] : memref<64x32xbf16, #tpu.memory_space<vmem>>, vector<64x32xbf16>
    %cst_14 = arith.constant dense<0.000000e+00> : vector<128x32xf32>
    %19 = tpu.matmul %17, %18, %cst_14 {dimension_numbers = #tpu.dot_dimension_numbers<[1], [0], [0], [1], [0, 0, 1, 1], [], []>} : vector<128x64xbf16>, vector<64x32xbf16>, vector<128x32xf32> -> vector<128x32xf32>
    %c0_15 = arith.constant 0 : index
    %c0_16 = arith.constant 0 : index
    %20 = vector.load %arg7[%c0_15, %c0_16] : memref<1x32xf32, #tpu.memory_space<vmem>>, vector<1x32xf32>
    %21 = vector.broadcast %20 : vector<1x32xf32> to vector<128x32xf32>
    %22 = arith.addf %19, %21 : vector<128x32xf32>
    %cst_17 = arith.constant 0.000000e+00 : f32
    %23 = vector.broadcast %cst_17 : f32 to vector<128x32xf32>
    %24 = arith.maximumf %22, %23 : vector<128x32xf32>
    %c0_18 = arith.constant 0 : index
    %c0_19 = arith.constant 0 : index
    %25 = vector.load %arg8[%c0_18, %c0_19] : memref<1x32xf32, #tpu.memory_space<vmem>>, vector<1x32xf32>
    %cst_20 = arith.constant dense<0.000000e+00> : vector<1x128xf32>
    %26 = tpu.matmul %25, %24, %cst_20 {dimension_numbers = #tpu.dot_dimension_numbers<[1], [1], [0], [0], [0, 0, 1, 0], [], []>} : vector<1x32xf32>, vector<128x32xf32>, vector<1x128xf32> -> vector<1x128xf32>
    %c0_21 = arith.constant 0 : index
    %c0_22 = arith.constant 0 : index
    %27 = vector.load %arg9[%c0_21, %c0_22] : memref<1x1xf32, #tpu.memory_space<vmem>>, vector<1x1xf32>
    %28 = vector.broadcast %27 : vector<1x1xf32> to vector<1x128xf32>
    %29 = arith.addf %26, %28 : vector<1x128xf32>
    %c0_23 = arith.constant 0 : index
    %c0_24 = arith.constant 0 : index
    %30 = vector.load %arg10[%c0_23, %c0_24] : memref<1x128xf32, #tpu.memory_space<vmem>>, vector<1x128xf32>
    tpu.vector_store %arg10[%c0_23, %c0_24], %29 {strides = array<i32>} : memref<1x128xf32, #tpu.memory_space<vmem>>, vector<1x128xf32>,
    return
  }
  func.func @transform_0(%arg0: i32) -> (i32, i32) {
    %c0_i32 = arith.constant 0 : i32
    %c0_i32_0 = arith.constant 0 : i32
    return %arg0, %c0_i32 : i32, i32
  }
  func.func @transform_1(%arg0: i32) -> (i32, i32) {
    %c0_i32 = arith.constant 0 : i32
    %c0_i32_0 = arith.constant 0 : i32
    %c0_i32_1 = arith.constant 0 : i32
    return %c0_i32, %c0_i32_0 : i32, i32
  }
  func.func @transform_2(%arg0: i32) -> (i32, i32) {
    %c0_i32 = arith.constant 0 : i32
    %c0_i32_0 = arith.constant 0 : i32
    %c0_i32_1 = arith.constant 0 : i32
    return %c0_i32, %c0_i32_0 : i32, i32
  }
  func.func @transform_3(%arg0: i32) -> (i32, i32) {
    %c0_i32 = arith.constant 0 : i32
    %c0_i32_0 = arith.constant 0 : i32
    %c0_i32_1 = arith.constant 0 : i32
    return %c0_i32, %c0_i32_0 : i32, i32
  }
  func.func @transform_4(%arg0: i32) -> (i32, i32) {
    %c0_i32 = arith.constant 0 : i32
    %c0_i32_0 = arith.constant 0 : i32
    %c0_i32_1 = arith.constant 0 : i32
    return %c0_i32, %c0_i32_0 : i32, i32
  }
  func.func @transform_5(%arg0: i32) -> (i32, i32) {
    %c0_i32 = arith.constant 0 : i32
    %c0_i32_0 = arith.constant 0 : i32
    %c0_i32_1 = arith.constant 0 : i32
    return %c0_i32, %c0_i32_0 : i32, i32
  }
  func.func @transform_6(%arg0: i32) -> (i32, i32) {
    %c0_i32 = arith.constant 0 : i32
    %c0_i32_0 = arith.constant 0 : i32
    %c0_i32_1 = arith.constant 0 : i32
    return %c0_i32, %c0_i32_0 : i32, i32
  }
  func.func @transform_7(%arg0: i32) -> (i32, i32) {
    %c0_i32 = arith.constant 0 : i32
    %c0_i32_0 = arith.constant 0 : i32
    %c0_i32_1 = arith.constant 0 : i32
    return %c0_i32, %c0_i32_0 : i32, i32
  }
  func.func @transform_8(%arg0: i32) -> (i32, i32) {
    %c0_i32 = arith.constant 0 : i32
    %c0_i32_0 = arith.constant 0 : i32
    %c0_i32_1 = arith.constant 0 : i32
    return %c0_i32, %c0_i32_0 : i32, i32
  }
  func.func @transform_9(%arg0: i32) -> (i32, i32) {
    %c0_i32 = arith.constant 0 : i32
    %c0_i32_0 = arith.constant 0 : i32
    return %c0_i32, %arg0 : i32, i32
  }
}

</mosaic_0001>

<llo_original>
// kernel: densenet_forward.1
$region0: #{densenet_forward.1}
  #allocation0 [shape = 'u32[]', space=smem, size = 0x4, offset = 0x4, fixed_abs, tag = 'smem constant byte address 0x4 - core index']
  #allocation1 [shape = 'u32[144,128]{1,0:T(1,128)}', space=vmem, size = 0x12000, scoped, tag = 'internal scratch']
  #allocation2 [shape = 'f32[1,1]{1,0:T(1,128)S(1)}', space=vmem, size = 0x200, scoped, tag = 'scoped memory for densenet_forward.1']
  %s0 = inlined_call_operand.vmem [shape: f32[8,202], index: 0, kind: input, shape index: {}]
  %s1 = inlined_call_operand.vmem [shape: bf16[202,128], index: 1, kind: input, shape index: {}]
  %s2 = inlined_call_operand.vmem [shape: f32[1,128], index: 2, kind: input, shape index: {}]
  %s3 = inlined_call_operand.vmem [shape: bf16[128,64], index: 3, kind: input, shape index: {}]
  %s4 = inlined_call_operand.vmem [shape: f32[1,64], index: 4, kind: input, shape index: {}]
  %s5 = inlined_call_operand.vmem [shape: bf16[64,32], index: 5, kind: input, shape index: {}]
  %s6 = inlined_call_operand.hbm [shape: f32[1,32], index: 6, kind: input, shape index: {}]
  %s7 = inlined_call_operand.vmem [shape: f32[1,32], index: 7, kind: input, shape index: {}]
  %s8 = inlined_call_operand.<no memory space> [shape: f32[1,1], index: 8, kind: input, shape index: {}]
  %s9 = inlined_call_operand.vmem [shape: f32[1,128], index: 9, kind: output, shape index: {}]
  %s10 = sld [smem:[#allocation0]]
  $region50: #{densenet_forward.1} parent=0
    _
  %s12 = ssub.s32 1, %s10
  %s13 = scalar_select 0, %s12, %s10
  %v14 = vstv %s8
  %15 = vst [vmem:[#allocation2] sm:$0x1] %v14
  $region1: #{densenet_forward.1} parent=0
    #allocation3 [shape = 'u8[512]{0}', space=vmem, size = 0x400, scoped, tag = 'input window, operand 6, single buffered']
    #allocation4 [shape = 's32[1]{0}', space=sflag, size = 0x4, scoped, tag = 'scoped memory for densenet_forward.1']
    %16 = vsyncpa [#allocation4], 0
    // Predicated region
    $region2: #{densenet_forward.1} parent=1 // pred_check
      _
    $region3: #{densenet_forward.1} parent=1 // pred_check_branch
      %18 = sbr.rel (0) target = $region5
    $region4: #{densenet_forward.1} parent=1 // pred_region
      _
    $region5: #{densenet_forward.1} parent=1 // pred_fallthru
      _
    // Predicated region
    $region6: #{densenet_forward.1} parent=1 // pred_check
      _
    $region7: #{densenet_forward.1} parent=1 // pred_check_branch
      %20 = sbr.rel (0) target = $region9
    $region8: #{densenet_forward.1} parent=1 // pred_region
      _
    $region9: #{densenet_forward.1} parent=1 // pred_fallthru
      _
    // Predicated region
    $region10: #{densenet_forward.1} parent=1 // pred_check
      _
    $region11: #{densenet_forward.1} parent=1 // pred_check_branch
      %22 = sbr.rel (0) target = $region13
    $region12: #{densenet_forward.1} parent=1 // pred_region
      _
    $region13: #{densenet_forward.1} parent=1 // pred_fallthru
      _
    // Predicated region
    $region14: #{densenet_forward.1} parent=1 // pred_check
      _
    $region15: #{densenet_forward.1} parent=1 // pred_check_branch
      %24 = sbr.rel (0) target = $region17
    $region16: #{densenet_forward.1} parent=1 // pred_region
      _
    $region17: #{densenet_forward.1} parent=1 // pred_fallthru
      _
    // Predicated region
    $region18: #{densenet_forward.1} parent=1 // pred_check
      _
    $region19: #{densenet_forward.1} parent=1 // pred_check_branch
      %26 = sbr.rel (0) target = $region21
    $region20: #{densenet_forward.1} parent=1 // pred_region
      _
    $region21: #{densenet_forward.1} parent=1 // pred_fallthru
      _
    // Predicated region
    $region22: #{densenet_forward.1} parent=1 // pred_check
      _
    $region23: #{densenet_forward.1} parent=1 // pred_check_branch
      %28 = sbr.rel (0) target = $region25
    $region24: #{densenet_forward.1} parent=1 // pred_region
      _
    $region25: #{densenet_forward.1} parent=1 // pred_fallthru
      _
    // Predicated region
    $region26: #{densenet_forward.1} parent=1 // pred_check
      _
    $region27: #{densenet_forward.1} parent=1 // pred_check_branch
      %30 = sbr.rel (0) target = $region29
    $region28: #{densenet_forward.1} parent=1 // pred_region
      %s32 = ssub.s32 16, 16
      %33 = vsyncadd [#allocation4], %s32
      %s35 = sshll.u32 [#allocation3], 4
      %s36 = int_to_ptr.vmem [resolvable:$true] %s35
      %38 = dma.hbm_to_vmem [thread:$0]  %s6, 16, %s36, [#allocation4]
    $region29: #{densenet_forward.1} parent=1 // pred_fallthru
      _
    // Predicated region
    $region30: #{densenet_forward.1} parent=1 // pred_check
      _
    $region31: #{densenet_forward.1} parent=1 // pred_check_branch
      %40 = sbr.rel (0) target = $region33
    $region32: #{densenet_forward.1} parent=1 // pred_region
      _
    $region33: #{densenet_forward.1} parent=1 // pred_fallthru
      _
    // Predicated region
    $region34: #{densenet_forward.1} parent=1 // pred_check
      _
    $region35: #{densenet_forward.1} parent=1 // pred_check_branch
      %42 = sbr.rel (0) target = $region37
    $region36: #{densenet_forward.1} parent=1 // pred_region
      _
    $region37: #{densenet_forward.1} parent=1 // pred_fallthru
      _
    // Predicated region
    $region38: #{densenet_forward.1} parent=1 // pred_check
      _
    $region39: #{densenet_forward.1} parent=1 // pred_check_branch
      %44 = sbr.rel (0) target = $region41
    $region40: #{densenet_forward.1} parent=1 // pred_region
      %45 = dma.done [#allocation4], 16
    $region41: #{densenet_forward.1} parent=1 // pred_fallthru
      _
    %v47 = vld [vmem:[%s0] sm:$0xff]
    %v48 = vld [vmem:[%s0 + $0x8] sm:$0xff]
    %v49 = vld [vmem:[%s0 + $0x10] sm:$0xff]
    %v50 = vld [vmem:[%s0 + $0x18] sm:$0xff]
    %v51 = vld [vmem:[%s0 + $0x20] sm:$0xff]
    %v52 = vld [vmem:[%s0 + $0x28] sm:$0xff]
    %v53 = vld [vmem:[%s0 + $0x30] sm:$0xff]
    %v54 = vld [vmem:[%s0 + $0x38] sm:$0xff]
    %v55 = vld [vmem:[%s0 + $0x40] sm:$0xff]
    %v56 = vld [vmem:[%s0 + $0x48] sm:$0xff]
    %v57 = vld [vmem:[%s0 + $0x50] sm:$0xff]
    %v58 = vld [vmem:[%s0 + $0x58] sm:$0xff]
    %v59 = vld [vmem:[%s0 + $0x60] sm:$0xff]
    %v60 = vld [vmem:[%s0 + $0x68] sm:$0xff]
    %v61 = vld [vmem:[%s0 + $0x70] sm:$0xff]
    %v62 = vld [vmem:[%s0 + $0x78] sm:$0xff]
    %v63 = vld [vmem:[%s0 + $0x80] sm:$0xff]
    %v64 = vld [vmem:[%s0 + $0x88] sm:$0xff]
    %v65 = vld [vmem:[%s0 + $0x90] sm:$0xff]
    %v66 = vld [vmem:[%s0 + $0x98] sm:$0xff]
    %v67 = vld [vmem:[%s0 + $0xa0] sm:$0xff]
    %v68 = vld [vmem:[%s0 + $0xa8] sm:$0xff]
    %v69 = vld [vmem:[%s0 + $0xb0] sm:$0xff]
    %v70 = vld [vmem:[%s0 + $0xb8] sm:$0xff]
    %v71 = vld [vmem:[%s0 + $0xc0] sm:$0xff]
    %v72 = vld [vmem:[%s0 + $0xc8] sm:$0xff]
    %v73 = vld [vmem:[%s0 + $0xd0] sm:$0xff]
    %v74 = vld [vmem:[%s0 + $0xd8] sm:$0xff]
    %v75 = vld [vmem:[%s0 + $0xe0] sm:$0xff]
    %v76 = vld [vmem:[%s0 + $0xe8] sm:$0xff]
    %v77 = vld [vmem:[%s0 + $0xf0] sm:$0xff]
    %v78 = vld [vmem:[%s0 + $0xf8] sm:$0xff]
    %v79 = vpack.c.bf16 %v49, %v47
    %v80 = vpack.c.bf16 %v50, %v48
    %v81 = vpack.c.bf16 %v53, %v51
    %v82 = vpack.c.bf16 %v54, %v52
    %v83 = vpack.c.bf16 %v57, %v55
    %v84 = vpack.c.bf16 %v58, %v56
    %v85 = vpack.c.bf16 %v61, %v59
    %v86 = vpack.c.bf16 %v62, %v60
    %v87 = vpack.c.bf16 %v65, %v63
    %v88 = vpack.c.bf16 %v66, %v64
    %v89 = vpack.c.bf16 %v69, %v67
    %v90 = vpack.c.bf16 %v70, %v68
    %v91 = vpack.c.bf16 %v73, %v71
    %v92 = vpack.c.bf16 %v74, %v72
    %v93 = vpack.c.bf16 %v77, %v75
    %v94 = vpack.c.bf16 %v78, %v76
    %v95 = vld [vmem:[%s1] sm:$0xf]
    %v96 = vld [vmem:[%s1 + $0x4] sm:$0xf]
    %v97 = vld [vmem:[%s1 + $0x8] sm:$0xf]
    %v98 = vld [vmem:[%s1 + $0xc] sm:$0xf]
    %v99 = vld [vmem:[%s1 + $0x10] sm:$0xf]
    %v100 = vld [vmem:[%s1 + $0x14] sm:$0xf]
    %v101 = vld [vmem:[%s1 + $0x18] sm:$0xf]
    %v102 = vld [vmem:[%s1 + $0x1c] sm:$0xf]
    %v103 = vld [vmem:[%s1 + $0x20] sm:$0xf]
    %v104 = vld [vmem:[%s1 + $0x24] sm:$0xf]
    %v105 = vld [vmem:[%s1 + $0x28] sm:$0xf]
    %v106 = vld [vmem:[%s1 + $0x2c] sm:$0xf]
    %v107 = vld [vmem:[%s1 + $0x30] sm:$0xf]
    %v108 = vld [vmem:[%s1 + $0x34] sm:$0xf]
    %v109 = vld [vmem:[%s1 + $0x38] sm:$0xf]
    %v110 = vld [vmem:[%s1 + $0x3c] sm:$0xf]
    %v111 = vld [vmem:[%s1 + $0x40] sm:$0xf]
    %v112 = vld [vmem:[%s1 + $0x44] sm:$0xf]
    %v113 = vld [vmem:[%s1 + $0x48] sm:$0xf]
    %v114 = vld [vmem:[%s1 + $0x4c] sm:$0xf]
    %v115 = vld [vmem:[%s1 + $0x50] sm:$0xf]
    %v116 = vld [vmem:[%s1 + $0x54] sm:$0xf]
    %v117 = vld [vmem:[%s1 + $0x58] sm:$0xf]
    %v118 = vld [vmem:[%s1 + $0x5c] sm:$0xf]
    %v119 = vld [vmem:[%s1 + $0x60] sm:$0xf]
    %v120 = vld [vmem:[%s1 + $0x64] sm:$0x1]
    %v121 = vld [vmem:[%s2] sm:$0x1]
    %v123 = vlaneseq
    %v124 = vshrl.u32 %v123, 7
    %v125 = vsub.s32 0, %v124
    %v126 = vrot.slane %v121, %v125
    %v154 = vunpack.c.l.b16 %v95
    %v155 = vunpack.c.l.b16 %v96
    %v156 = vunpack.c.l.b16 %v97
    %v157 = vunpack.c.l.b16 %v98
    %v158 = vunpack.c.l.b16 %v99
    %v159 = vunpack.c.l.b16 %v100
    %v160 = vunpack.c.l.b16 %v101
    %v161 = vunpack.c.l.b16 %v102
    %v162 = vunpack.c.l.b16 %v103
    %v163 = vunpack.c.l.b16 %v104
    %v164 = vunpack.c.l.b16 %v105
    %v165 = vunpack.c.l.b16 %v106
    %v166 = vunpack.c.l.b16 %v107
    %v167 = vunpack.c.l.b16 %v108
    %v168 = vunpack.c.l.b16 %v109
    %v169 = vunpack.c.l.b16 %v110
    %v170 = vunpack.c.l.b16 %v111
    %v171 = vunpack.c.l.b16 %v112
    %v172 = vunpack.c.l.b16 %v113
    %v173 = vunpack.c.l.b16 %v114
    %v174 = vunpack.c.l.b16 %v115
    %v175 = vunpack.c.l.b16 %v116
    %v176 = vunpack.c.l.b16 %v117
    %v177 = vunpack.c.l.b16 %v118
    %v178 = vunpack.c.l.b16 %v119
    %v179 = vunpack.c.l.b16 %v120
    %v180 = vpack.c.b16 %v155, %v154
    %v181 = vpack.c.b16 %v157, %v156
    %v182 = vpack.c.b16 %v159, %v158
    %v183 = vpack.c.b16 %v161, %v160
    %v184 = vpack.c.b16 %v163, %v162
    %v185 = vpack.c.b16 %v165, %v164
    %v186 = vpack.c.b16 %v167, %v166
    %v187 = vpack.c.b16 %v169, %v168
    %v188 = vpack.c.b16 %v171, %v170
    %v189 = vpack.c.b16 %v173, %v172
    %v190 = vpack.c.b16 %v175, %v174
    %v191 = vpack.c.b16 %v177, %v176
    %v192 = vpack.c.b16 %v179, %v178
    %vm205 = vcmask 605184
    %v207 = vsel %vm205, %v80, 0
    %v210 = vsel %vm205, %v82, 0
    %v213 = vsel %vm205, %v84, 0
    %v216 = vsel %vm205, %v86, 0
    %v219 = vsel %vm205, %v88, 0
    %v222 = vsel %vm205, %v90, 0
    %v225 = vsel %vm205, %v92, 0
    %v228 = vsel %vm205, %v94, 0
    %vm230 = vcmask 1044480
    %v232 = vsel %vm230, %v192, 0
    %234 = vmatprep.subr.bf16.mxu0 0
    %235 = vmatpush1.bf16.msra.mxu0 %v180
    %236 = vmatprep.subr.bf16.mxu0 0
    %237 = vmatpush1.bf16.msra.mxu0 %v181
    %238 = vmatprep.subr.bf16.mxu0 0
    %239 = vmatpush1.bf16.msra.mxu0 %v182
    %240 = vmatprep.subr.bf16.mxu0 0
    %241 = vmatpush1.bf16.msra.mxu0 %v183
    %242 = vmatprep.subr.bf16.mxu0 0
    %243 = vmatpush1.bf16.msra.mxu0 %v184
    %244 = vmatprep.subr.bf16.mxu0 0
    %245 = vmatpush1.bf16.msra.mxu0 %v185
    %246 = vmatprep.subr.bf16.mxu0 0
    %247 = vmatpush1.bf16.msra.mxu0 %v186
    %248 = vmatprep.subr.bf16.mxu0 0
    %249 = vmatpush1.bf16.msra.mxu0 %v187
    %250 = vmatprep.subr.bf16.mxu0 0
    %251 = vmatpush1.bf16.msra.mxu0 %v188
    %252 = vmatprep.subr.bf16.mxu0 0
    %253 = vmatpush1.bf16.msra.mxu0 %v189
    %254 = vmatprep.subr.bf16.mxu0 0
    %255 = vmatpush1.bf16.msra.mxu0 %v190
    %256 = vmatprep.subr.bf16.mxu0 0
    %257 = vmatpush1.bf16.msra.mxu0 %v191
    %258 = vmatprep.subr.bf16.mxu0 0
    %259 = vmatpush1.bf16.msra.mxu0 %v232
    %260 = vmatprep.subr.bf16.mxu0 0
    %261 = vmatpush1.bf16.msra.mxu0 0
    %262 = vmatprep.subr.bf16.mxu0 0
    %263 = vmatpush1.bf16.msra.mxu0 0
    %264 = vmatprep.subr.bf16.mxu0 0
    %265 = vmatpush1.bf16.msra.mxu0 0
    %266 = vmatprep.mubr.bf16.mxu0 %v207
    %267 = vmatmul.mubr.bf16.gmra.mrb[0].mxu0 %v79
    %v268 = vpop.f32.mrb[0].mxu0
    %v269 = vadd.f32 %v126, %v268
    %v270 = vpop.f32.mrb[0].mxu0
    %v271 = vpop.f32.mrb[0].mxu0
    %v272 = vadd.f32 %v126, %v271
    %v273 = vpop.f32.mrb[0].mxu0
    %274 = vmatprep.mubr.bf16.mxu0 %v210
    %275 = vmatmul.mubr.bf16.gmra.mrb[0].mxu0 %v81
    %v276 = vpop.f32.mrb[0].mxu0
    %v277 = vadd.f32 %v126, %v276
    %v278 = vpop.f32.mrb[0].mxu0
    %v279 = vpop.f32.mrb[0].mxu0
    %v280 = vadd.f32 %v126, %v279
    %v281 = vpop.f32.mrb[0].mxu0
    %282 = vmatprep.mubr.bf16.mxu0 %v213
    %283 = vmatmul.mubr.bf16.gmra.mrb[0].mxu0 %v83
    %v284 = vpop.f32.mrb[0].mxu0
    %v285 = vadd.f32 %v126, %v284
    %v286 = vpop.f32.mrb[0].mxu0
    %v287 = vpop.f32.mrb[0].mxu0
    %v288 = vadd.f32 %v126, %v287
    %v289 = vpop.f32.mrb[0].mxu0
    %290 = vmatprep.mubr.bf16.mxu0 %v216
    %291 = vmatmul.mubr.bf16.gmra.mrb[0].mxu0 %v85
    %v292 = vpop.f32.mrb[0].mxu0
    %v293 = vadd.f32 %v126, %v292
    %v294 = vpop.f32.mrb[0].mxu0
    %v295 = vpop.f32.mrb[0].mxu0
    %v296 = vadd.f32 %v126, %v295
    %v297 = vpop.f32.mrb[0].mxu0
    %298 = vmatprep.mubr.bf16.mxu0 %v219
    %299 = vmatmul.mubr.bf16.gmra.mrb[0].mxu0 %v87
    %v300 = vpop.f32.mrb[0].mxu0
    %v301 = vadd.f32 %v126, %v300
    %v302 = vpop.f32.mrb[0].mxu0
    %v303 = vpop.f32.mrb[0].mxu0
    %v304 = vadd.f32 %v126, %v303
    %v305 = vpop.f32.mrb[0].mxu0
    %306 = vmatprep.mubr.bf16.mxu0 %v222
    %307 = vmatmul.mubr.bf16.gmra.mrb[0].mxu0 %v89
    %v308 = vpop.f32.mrb[0].mxu0
    %v309 = vadd.f32 %v126, %v308
    %v310 = vpop.f32.mrb[0].mxu0
    %v311 = vpop.f32.mrb[0].mxu0
    %v312 = vadd.f32 %v126, %v311
    %v313 = vpop.f32.mrb[0].mxu0
    %314 = vmatprep.mubr.bf16.mxu0 %v225
    %315 = vmatmul.mubr.bf16.gmra.mrb[0].mxu0 %v91
    %v316 = vpop.f32.mrb[0].mxu0
    %v317 = vadd.f32 %v126, %v316
    %v318 = vpop.f32.mrb[0].mxu0
    %v319 = vpop.f32.mrb[0].mxu0
    %v320 = vadd.f32 %v126, %v319
    %v321 = vpop.f32.mrb[0].mxu0
    %322 = vmatprep.mubr.bf16.mxu0 %v228
    %323 = vmatmul.mubr.bf16.gmra.mrb[0].mxu0 %v93
    %v324 = vpop.f32.mrb[0].mxu0
    %v325 = vadd.f32 %v126, %v324
    %v326 = vpop.f32.mrb[0].mxu0
    %v327 = vpop.f32.mrb[0].mxu0
    %v328 = vadd.f32 %v126, %v327
    %v329 = vpop.f32.mrb[0].mxu0
    %330 = vdwg.mxu0
    %v331 = vmax.f32 %v269, 0.0
    %v332 = vmax.f32 %v272, 0.0
    %v333 = vmax.f32 %v277, 0.0
    %v334 = vmax.f32 %v280, 0.0
    %v335 = vmax.f32 %v285, 0.0
    %v336 = vmax.f32 %v288, 0.0
    %v337 = vmax.f32 %v293, 0.0
    %v338 = vmax.f32 %v296, 0.0
    %v339 = vmax.f32 %v301, 0.0
    %v340 = vmax.f32 %v304, 0.0
    %v341 = vmax.f32 %v309, 0.0
    %v342 = vmax.f32 %v312, 0.0
    %v343 = vmax.f32 %v317, 0.0
    %v344 = vmax.f32 %v320, 0.0
    %v345 = vmax.f32 %v325, 0.0
    %v346 = vmax.f32 %v328, 0.0
    %v347 = vpack.c.bf16 %v332, %v331
    %v348 = vpack.c.bf16 %v334, %v333
    %v349 = vpack.c.bf16 %v336, %v335
    %v350 = vpack.c.bf16 %v338, %v337
    %v351 = vpack.c.bf16 %v340, %v339
    %v352 = vpack.c.bf16 %v342, %v341
    %v353 = vpack.c.bf16 %v344, %v343
    %v354 = vpack.c.bf16 %v346, %v345
    %v355 = vld [vmem:[%s3] sm:$0xf]
    %v356 = vld [vmem:[%s3 + $0x4] sm:$0xf]
    %v357 = vld [vmem:[%s3 + $0x8] sm:$0xf]
    %v358 = vld [vmem:[%s3 + $0xc] sm:$0xf]
    %v359 = vld [vmem:[%s3 + $0x10] sm:$0xf]
    %v360 = vld [vmem:[%s3 + $0x14] sm:$0xf]
    %v361 = vld [vmem:[%s3 + $0x18] sm:$0xf]
    %v362 = vld [vmem:[%s3 + $0x1c] sm:$0xf]
    %v363 = vld [vmem:[%s3 + $0x20] sm:$0xf]
    %v364 = vld [vmem:[%s3 + $0x24] sm:$0xf]
    %v365 = vld [vmem:[%s3 + $0x28] sm:$0xf]
    %v366 = vld [vmem:[%s3 + $0x2c] sm:$0xf]
    %v367 = vld [vmem:[%s3 + $0x30] sm:$0xf]
    %v368 = vld [vmem:[%s3 + $0x34] sm:$0xf]
    %v369 = vld [vmem:[%s3 + $0x38] sm:$0xf]
    %v370 = vld [vmem:[%s3 + $0x3c] sm:$0xf]
    %v371 = vld [vmem:[%s4] sm:$0x1]
    %v373 = vlaneseq
    %v374 = vshrl.u32 %v373, 7
    %v375 = vsub.s32 0, %v374
    %v376 = vrot.slane %v371, %v375
    %v394 = vunpack.c.l.b16 %v355
    %v395 = vunpack.c.l.b16 %v356
    %v396 = vunpack.c.l.b16 %v357
    %v397 = vunpack.c.l.b16 %v358
    %v398 = vunpack.c.l.b16 %v359
    %v399 = vunpack.c.l.b16 %v360
    %v400 = vunpack.c.l.b16 %v361
    %v401 = vunpack.c.l.b16 %v362
    %v402 = vunpack.c.l.b16 %v363
    %v403 = vunpack.c.l.b16 %v364
    %v404 = vunpack.c.l.b16 %v365
    %v405 = vunpack.c.l.b16 %v366
    %v406 = vunpack.c.l.b16 %v367
    %v407 = vunpack.c.l.b16 %v368
    %v408 = vunpack.c.l.b16 %v369
    %v409 = vunpack.c.l.b16 %v370
    %v410 = vpack.c.b16 %v395, %v394
    %v411 = vpack.c.b16 %v397, %v396
    %v412 = vpack.c.b16 %v399, %v398
    %v413 = vpack.c.b16 %v401, %v400
    %v414 = vpack.c.b16 %v403, %v402
    %v415 = vpack.c.b16 %v405, %v404
    %v416 = vpack.c.b16 %v407, %v406
    %v417 = vpack.c.b16 %v409, %v408
    %426 = vmatprep.subr.bf16.mxu0 0
    %427 = vmatpush1.bf16.msra.mxu0 %v410
    %428 = vmatprep.subr.bf16.mxu0 0
    %429 = vmatpush1.bf16.msra.mxu0 %v411
    %430 = vmatprep.subr.bf16.mxu0 0
    %431 = vmatpush1.bf16.msra.mxu0 %v412
    %432 = vmatprep.subr.bf16.mxu0 0
    %433 = vmatpush1.bf16.msra.mxu0 %v413
    %434 = vmatprep.subr.bf16.mxu0 0
    %435 = vmatpush1.bf16.msra.mxu0 %v414
    %436 = vmatprep.subr.bf16.mxu0 0
    %437 = vmatpush1.bf16.msra.mxu0 %v415
    %438 = vmatprep.subr.bf16.mxu0 0
    %439 = vmatpush1.bf16.msra.mxu0 %v416
    %440 = vmatprep.subr.bf16.mxu0 0
    %441 = vmatpush1.bf16.msra.mxu0 %v417
    %442 = vmatprep.subr.bf16.mxu0 0
    %443 = vmatpush1.bf16.msra.mxu0 0
    %444 = vmatprep.subr.bf16.mxu0 0
    %445 = vmatpush1.bf16.msra.mxu0 0
    %446 = vmatprep.subr.bf16.mxu0 0
    %447 = vmatpush1.bf16.msra.mxu0 0
    %448 = vmatprep.subr.bf16.mxu0 0
    %449 = vmatpush1.bf16.msra.mxu0 0
    %450 = vmatprep.subr.bf16.mxu0 0
    %451 = vmatpush1.bf16.msra.mxu0 0
    %452 = vmatprep.subr.bf16.mxu0 0
    %453 = vmatpush1.bf16.msra.mxu0 0
    %454 = vmatprep.subr.bf16.mxu0 0
    %455 = vmatpush1.bf16.msra.mxu0 0
    %456 = vmatprep.subr.bf16.mxu0 0
    %457 = vmatpush1.bf16.msra.mxu0 0
    %458 = vmatprep.mubr.bf16.mxu0 0
    %459 = vmatmul.mubr.bf16.gmra.mrb[0].mxu0 %v347
    %v460 = vpop.f32.mrb[0].mxu0
    %v461 = vadd.f32 %v376, %v460
    %v462 = vpop.f32.mrb[0].mxu0
    %v463 = vpop.f32.mrb[0].mxu0
    %v464 = vadd.f32 %v376, %v463
    %v465 = vpop.f32.mrb[0].mxu0
    %466 = vmatprep.mubr.bf16.mxu0 0
    %467 = vmatmul.mubr.bf16.gmra.mrb[0].mxu0 %v348
    %v468 = vpop.f32.mrb[0].mxu0
    %v469 = vadd.f32 %v376, %v468
    %v470 = vpop.f32.mrb[0].mxu0
    %v471 = vpop.f32.mrb[0].mxu0
    %v472 = vadd.f32 %v376, %v471
    %v473 = vpop.f32.mrb[0].mxu0
    %474 = vmatprep.mubr.bf16.mxu0 0
    %475 = vmatmul.mubr.bf16.gmra.mrb[0].mxu0 %v349
    %v476 = vpop.f32.mrb[0].mxu0
    %v477 = vadd.f32 %v376, %v476
    %v478 = vpop.f32.mrb[0].mxu0
    %v479 = vpop.f32.mrb[0].mxu0
    %v480 = vadd.f32 %v376, %v479
    %v481 = vpop.f32.mrb[0].mxu0
    %482 = vmatprep.mubr.bf16.mxu0 0
    %483 = vmatmul.mubr.bf16.gmra.mrb[0].mxu0 %v350
    %v484 = vpop.f32.mrb[0].mxu0
    %v485 = vadd.f32 %v376, %v484
    %v486 = vpop.f32.mrb[0].mxu0
    %v487 = vpop.f32.mrb[0].mxu0
    %v488 = vadd.f32 %v376, %v487
    %v489 = vpop.f32.mrb[0].mxu0
    %490 = vmatprep.mubr.bf16.mxu0 0
    %491 = vmatmul.mubr.bf16.gmra.mrb[0].mxu0 %v351
    %v492 = vpop.f32.mrb[0].mxu0
    %v493 = vadd.f32 %v376, %v492
    %v494 = vpop.f32.mrb[0].mxu0
    %v495 = vpop.f32.mrb[0].mxu0
    %v496 = vadd.f32 %v376, %v495
    %v497 = vpop.f32.mrb[0].mxu0
    %498 = vmatprep.mubr.bf16.mxu0 0
    %499 = vmatmul.mubr.bf16.gmra.mrb[0].mxu0 %v352
    %v500 = vpop.f32.mrb[0].mxu0
    %v501 = vadd.f32 %v376, %v500
    %v502 = vpop.f32.mrb[0].mxu0
    %v503 = vpop.f32.mrb[0].mxu0
    %v504 = vadd.f32 %v376, %v503
    %v505 = vpop.f32.mrb[0].mxu0
    %506 = vmatprep.mubr.bf16.mxu0 0
    %507 = vmatmul.mubr.bf16.gmra.mrb[0].mxu0 %v353
    %v508 = vpop.f32.mrb[0].mxu0
    %v509 = vadd.f32 %v376, %v508
    %v510 = vpop.f32.mrb[0].mxu0
    %v511 = vpop.f32.mrb[0].mxu0
    %v512 = vadd.f32 %v376, %v511
    %v513 = vpop.f32.mrb[0].mxu0
    %514 = vmatprep.mubr.bf16.mxu0 0
    %515 = vmatmul.mubr.bf16.gmra.mrb[0].mxu0 %v354
    %v516 = vpop.f32.mrb[0].mxu0
    %v517 = vadd.f32 %v376, %v516
    %v518 = vpop.f32.mrb[0].mxu0
    %v519 = vpop.f32.mrb[0].mxu0
    %v520 = vadd.f32 %v376, %v519
    %v521 = vpop.f32.mrb[0].mxu0
    %522 = vdwg.mxu0
    %v523 = vmax.f32 %v461, 0.0
    %v524 = vmax.f32 %v464, 0.0
    %v525 = vmax.f32 %v469, 0.0
    %v526 = vmax.f32 %v472, 0.0
    %v527 = vmax.f32 %v477, 0.0
    %v528 = vmax.f32 %v480, 0.0
    %v529 = vmax.f32 %v485, 0.0
    %v530 = vmax.f32 %v488, 0.0
    %v531 = vmax.f32 %v493, 0.0
    %v532 = vmax.f32 %v496, 0.0
    %v533 = vmax.f32 %v501, 0.0
    %v534 = vmax.f32 %v504, 0.0
    %v535 = vmax.f32 %v509, 0.0
    %v536 = vmax.f32 %v512, 0.0
    %v537 = vmax.f32 %v517, 0.0
    %v538 = vmax.f32 %v520, 0.0
    %v539 = vpack.c.bf16 %v524, %v523
    %v540 = vpack.c.bf16 %v526, %v525
    %v541 = vpack.c.bf16 %v528, %v527
    %v542 = vpack.c.bf16 %v530, %v529
    %v543 = vpack.c.bf16 %v532, %v531
    %v544 = vpack.c.bf16 %v534, %v533
    %v545 = vpack.c.bf16 %v536, %v535
    %v546 = vpack.c.bf16 %v538, %v537
    %v547 = vld [vmem:[%s5] sm:$0xf]
    %v548 = vld [vmem:[%s5 + $0x4] sm:$0xf]
    %v549 = vld [vmem:[%s5 + $0x8] sm:$0xf]
    %v550 = vld [vmem:[%s5 + $0xc] sm:$0xf]
    %v551 = vld [vmem:[%s5 + $0x10] sm:$0xf]
    %v552 = vld [vmem:[%s5 + $0x14] sm:$0xf]
    %v553 = vld [vmem:[%s5 + $0x18] sm:$0xf]
    %v554 = vld [vmem:[%s5 + $0x1c] sm:$0xf]
    %v555 = vld [vmem:[#allocation3] sm:$0x1]
    %v557 = vlaneseq
    %v558 = vshrl.u32 %v557, 7
    %v559 = vsub.s32 0, %v558
    %v560 = vrot.slane %v555, %v559
    %v570 = vunpack.c.l.b16 %v547
    %v571 = vunpack.c.l.b16 %v548
    %v572 = vunpack.c.l.b16 %v549
    %v573 = vunpack.c.l.b16 %v550
    %v574 = vunpack.c.l.b16 %v551
    %v575 = vunpack.c.l.b16 %v552
    %v576 = vunpack.c.l.b16 %v553
    %v577 = vunpack.c.l.b16 %v554
    %v578 = vpack.c.b16 %v571, %v570
    %v579 = vpack.c.b16 %v573, %v572
    %v580 = vpack.c.b16 %v575, %v574
    %v581 = vpack.c.b16 %v577, %v576
    %vm586 = vcmask 523264
    %v588 = vsel %vm586, %v539, 0
    %v591 = vsel %vm586, %v540, 0
    %v594 = vsel %vm586, %v541, 0
    %v597 = vsel %vm586, %v542, 0
    %v600 = vsel %vm586, %v543, 0
    %v603 = vsel %vm586, %v544, 0
    %v606 = vsel %vm586, %v545, 0
    %v609 = vsel %vm586, %v546, 0
    %611 = vmatprep.subr.bf16.mxu0 0
    %612 = vmatpush1.bf16.msra.mxu0 %v578
    %613 = vmatprep.subr.bf16.mxu0 0
    %614 = vmatpush1.bf16.msra.mxu0 %v579
    %615 = vmatprep.subr.bf16.mxu0 0
    %616 = vmatpush1.bf16.msra.mxu0 %v580
    %617 = vmatprep.subr.bf16.mxu0 0
    %618 = vmatpush1.bf16.msra.mxu0 %v581
    %619 = vmatprep.subr.bf16.mxu0 0
    %620 = vmatpush1.bf16.msra.mxu0 0
    %621 = vmatprep.subr.bf16.mxu0 0
    %622 = vmatpush1.bf16.msra.mxu0 0
    %623 = vmatprep.subr.bf16.mxu0 0
    %624 = vmatpush1.bf16.msra.mxu0 0
    %625 = vmatprep.subr.bf16.mxu0 0
    %626 = vmatpush1.bf16.msra.mxu0 0
    %627 = vmatprep.subr.bf16.mxu0 0
    %628 = vmatpush1.bf16.msra.mxu0 0
    %629 = vmatprep.subr.bf16.mxu0 0
    %630 = vmatpush1.bf16.msra.mxu0 0
    %631 = vmatprep.subr.bf16.mxu0 0
    %632 = vmatpush1.bf16.msra.mxu0 0
    %633 = vmatprep.subr.bf16.mxu0 0
    %634 = vmatpush1.bf16.msra.mxu0 0
    %635 = vmatprep.subr.bf16.mxu0 0
    %636 = vmatpush1.bf16.msra.mxu0 0
    %637 = vmatprep.subr.bf16.mxu0 0
    %638 = vmatpush1.bf16.msra.mxu0 0
    %639 = vmatprep.subr.bf16.mxu0 0
    %640 = vmatpush1.bf16.msra.mxu0 0
    %641 = vmatprep.subr.bf16.mxu0 0
    %642 = vmatpush1.bf16.msra.mxu0 0
    %643 = vmatprep.mubr.bf16.mxu0 0
    %644 = vmatmul.mubr.bf16.gmra.mrb[0].mxu0 %v588
    %v645 = vpop.f32.mrb[0].mxu0
    %v646 = vadd.f32 %v560, %v645
    %v647 = vpop.f32.mrb[0].mxu0
    %v648 = vpop.f32.mrb[0].mxu0
    %v649 = vadd.f32 %v560, %v648
    %v650 = vpop.f32.mrb[0].mxu0
    %651 = vmatprep.mubr.bf16.mxu0 0
    %652 = vmatmul.mubr.bf16.gmra.mrb[0].mxu0 %v591
    %v653 = vpop.f32.mrb[0].mxu0
    %v654 = vadd.f32 %v560, %v653
    %v655 = vpop.f32.mrb[0].mxu0
    %v656 = vpop.f32.mrb[0].mxu0
    %v657 = vadd.f32 %v560, %v656
    %v658 = vpop.f32.mrb[0].mxu0
    %659 = vmatprep.mubr.bf16.mxu0 0
    %660 = vmatmul.mubr.bf16.gmra.mrb[0].mxu0 %v594
    %v661 = vpop.f32.mrb[0].mxu0
    %v662 = vadd.f32 %v560, %v661
    %v663 = vpop.f32.mrb[0].mxu0
    %v664 = vpop.f32.mrb[0].mxu0
    %v665 = vadd.f32 %v560, %v664
    %v666 = vpop.f32.mrb[0].mxu0
    %667 = vmatprep.mubr.bf16.mxu0 0
    %668 = vmatmul.mubr.bf16.gmra.mrb[0].mxu0 %v597
    %v669 = vpop.f32.mrb[0].mxu0
    %v670 = vadd.f32 %v560, %v669
    %v671 = vpop.f32.mrb[0].mxu0
    %v672 = vpop.f32.mrb[0].mxu0
    %v673 = vadd.f32 %v560, %v672
    %v674 = vpop.f32.mrb[0].mxu0
    %675 = vmatprep.mubr.bf16.mxu0 0
    %676 = vmatmul.mubr.bf16.gmra.mrb[0].mxu0 %v600
    %v677 = vpop.f32.mrb[0].mxu0
    %v678 = vadd.f32 %v560, %v677
    %v679 = vpop.f32.mrb[0].mxu0
    %v680 = vpop.f32.mrb[0].mxu0
    %v681 = vadd.f32 %v560, %v680
    %v682 = vpop.f32.mrb[0].mxu0
    %683 = vmatprep.mubr.bf16.mxu0 0
    %684 = vmatmul.mubr.bf16.gmra.mrb[0].mxu0 %v603
    %v685 = vpop.f32.mrb[0].mxu0
    %v686 = vadd.f32 %v560, %v685
    %v687 = vpop.f32.mrb[0].mxu0
    %v688 = vpop.f32.mrb[0].mxu0
    %v689 = vadd.f32 %v560, %v688
    %v690 = vpop.f32.mrb[0].mxu0
    %691 = vmatprep.mubr.bf16.mxu0 0
    %692 = vmatmul.mubr.bf16.gmra.mrb[0].mxu0 %v606
    %v693 = vpop.f32.mrb[0].mxu0
    %v694 = vadd.f32 %v560, %v693
    %v695 = vpop.f32.mrb[0].mxu0
    %v696 = vpop.f32.mrb[0].mxu0
    %v697 = vadd.f32 %v560, %v696
    %v698 = vpop.f32.mrb[0].mxu0
    %699 = vmatprep.mubr.bf16.mxu0 0
    %700 = vmatmul.mubr.bf16.gmra.mrb[0].mxu0 %v609
    %v701 = vpop.f32.mrb[0].mxu0
    %v702 = vadd.f32 %v560, %v701
    %v703 = vpop.f32.mrb[0].mxu0
    %v704 = vpop.f32.mrb[0].mxu0
    %v705 = vadd.f32 %v560, %v704
    %v706 = vpop.f32.mrb[0].mxu0
    %707 = vdwg.mxu0
    %v708 = vmax.f32 %v646, 0.0
    %v709 = vmax.f32 %v649, 0.0
    %v710 = vmax.f32 %v654, 0.0
    %v711 = vmax.f32 %v657, 0.0
    %v712 = vmax.f32 %v662, 0.0
    %v713 = vmax.f32 %v665, 0.0
    %v714 = vmax.f32 %v670, 0.0
    %v715 = vmax.f32 %v673, 0.0
    %v716 = vmax.f32 %v678, 0.0
    %v717 = vmax.f32 %v681, 0.0
    %v718 = vmax.f32 %v686, 0.0
    %v719 = vmax.f32 %v689, 0.0
    %v720 = vmax.f32 %v694, 0.0
    %v721 = vmax.f32 %v697, 0.0
    %v722 = vmax.f32 %v702, 0.0
    %v723 = vmax.f32 %v705, 0.0
    %v724 = vld [vmem:[%s7] sm:$0x1]
    %v725 = vld [vmem:[#allocation2] sm:$0x1]
    %727 = vset.pattern.permute.xlu0 0
    %728 = vperm.xlu0 %727, %v725
    %v729 = vpop.permute.xlu0 %728
    %v731 = vlaneseq
    %v732 = vshrl.u32 %v731, 7
    %v733 = vsub.s32 0, %v732
    %v734 = vrot.slane %v729, %v733
    %vm735 = vcmask 261120
    %v737 = vsel %vm735, %v724, 0
    %v740 = vsel %vm735, %v708, 0
    %v743 = vsel %vm735, %v709, 0
    %v746 = vsel %vm735, %v710, 0
    %v749 = vsel %vm735, %v711, 0
    %v752 = vsel %vm735, %v712, 0
    %v755 = vsel %vm735, %v713, 0
    %v758 = vsel %vm735, %v714, 0
    %v761 = vsel %vm735, %v715, 0
    %v764 = vsel %vm735, %v716, 0
    %v767 = vsel %vm735, %v717, 0
    %v770 = vsel %vm735, %v718, 0
    %v773 = vsel %vm735, %v719, 0
    %v776 = vsel %vm735, %v720, 0
    %v779 = vsel %vm735, %v721, 0
    %v782 = vsel %vm735, %v722, 0
    %v785 = vsel %vm735, %v723, 0
    %787 = vmatprep.subr.mxu0 0.0
    %788 = vmatpush1.xpose.msra.mxu0 %v740
    %789 = vmatprep.subr.mxu0 0.0
    %790 = vmatpush1.xpose.msra.mxu0 %v743
    %791 = vmatprep.subr.mxu0 0.0
    %792 = vmatpush1.xpose.msra.mxu0 %v746
    %793 = vmatprep.subr.mxu0 0.0
    %794 = vmatpush1.xpose.msra.mxu0 %v749
    %795 = vmatprep.subr.mxu0 0.0
    %796 = vmatpush1.xpose.msra.mxu0 %v752
    %797 = vmatprep.subr.mxu0 0.0
    %798 = vmatpush1.xpose.msra.mxu0 %v755
    %799 = vmatprep.subr.mxu0 0.0
    %800 = vmatpush1.xpose.msra.mxu0 %v758
    %801 = vmatprep.subr.mxu0 0.0
    %802 = vmatpush1.xpose.msra.mxu0 %v761
    %803 = vmatprep.subr.mxu0 0.0
    %804 = vmatpush1.xpose.msra.mxu0 %v764
    %805 = vmatprep.subr.mxu0 0.0
    %806 = vmatpush1.xpose.msra.mxu0 %v767
    %807 = vmatprep.subr.mxu0 0.0
    %808 = vmatpush1.xpose.msra.mxu0 %v770
    %809 = vmatprep.subr.mxu0 0.0
    %810 = vmatpush1.xpose.msra.mxu0 %v773
    %811 = vmatprep.subr.mxu0 0.0
    %812 = vmatpush1.xpose.msra.mxu0 %v776
    %813 = vmatprep.subr.mxu0 0.0
    %814 = vmatpush1.xpose.msra.mxu0 %v779
    %815 = vmatprep.subr.mxu0 0.0
    %816 = vmatpush1.xpose.msra.mxu0 %v782
    %817 = vmatprep.subr.mxu0 0.0
    %818 = vmatpush1.xpose.msra.mxu0 %v785
    %819 = vmatprep.subr.mxu0 0.0
    %820 = vmatpush1.xpose.msra.mxu0 0.0
    %821 = vmatprep.subr.mxu0 0.0
    %822 = vmatpush1.xpose.msra.mxu0 0.0
    %823 = vmatprep.subr.mxu0 0.0
    %824 = vmatpush1.xpose.msra.mxu0 0.0
    %825 = vmatprep.subr.mxu0 0.0
    %826 = vmatpush1.xpose.msra.mxu0 0.0
    %827 = vmatprep.subr.mxu0 0.0
    %828 = vmatpush1.xpose.msra.mxu0 0.0
    %829 = vmatprep.subr.mxu0 0.0
    %830 = vmatpush1.xpose.msra.mxu0 0.0
    %831 = vmatprep.subr.mxu0 0.0
    %832 = vmatpush1.xpose.msra.mxu0 0.0
    %833 = vmatprep.subr.mxu0 0.0
    %834 = vmatpush1.xpose.msra.mxu0 0.0
    %835 = vmatprep.subr.mxu0 0.0
    %836 = vmatpush1.xpose.msra.mxu0 0.0
    %837 = vmatprep.subr.mxu0 0.0
    %838 = vmatpush1.xpose.msra.mxu0 0.0
    %839 = vmatprep.subr.mxu0 0.0
    %840 = vmatpush1.xpose.msra.mxu0 0.0
    %841 = vmatprep.subr.mxu0 0.0
    %842 = vmatpush1.xpose.msra.mxu0 0.0
    %843 = vmatprep.subr.mxu0 0.0
    %844 = vmatpush1.xpose.msra.mxu0 0.0
    %845 = vmatprep.subr.mxu0 0.0
    %846 = vmatpush1.xpose.msra.mxu0 0.0
    %847 = vmatprep.subr.mxu0 0.0
    %848 = vmatpush1.xpose.msra.mxu0 0.0
    %849 = vmatprep.subr.mxu0 0.0
    %850 = vmatpush1.xpose.msra.mxu0 0.0
    %851 = vmatprep.mubr.f32.mxu0 0.0
    %852 = vmatmul.mubr.f32.gmra.mrb[0].mxu0 %v737
    %v853 = vpop.f32.mrb[0].mxu0
    %v854 = vadd.f32 %v734, %v853
    %v855 = vpop.f32.mrb[0].mxu0
    %856 = vdwg.mxu0
    %857 = vst [vmem:[%s9] sm:$0x1] %v854
    // Predicated region
    $region42: #{densenet_forward.1} parent=1 // pred_check
      _
    $region43: #{densenet_forward.1} parent=1 // pred_check_branch
      %859 = sbr.rel (0) target = $region45
    $region44: #{densenet_forward.1} parent=1 // pred_region
      _
    $region45: #{densenet_forward.1} parent=1 // pred_fallthru
      _
    // Predicated region
    $region46: #{densenet_forward.1} parent=1 // pred_check
      _
    $region47: #{densenet_forward.1} parent=1 // pred_check_branch
      %861 = sbr.rel (0) target = $region49
    $region48: #{densenet_forward.1} parent=1 // pred_region
      _
    $region49: #{densenet_forward.1} parent=1 // pred_fallthru
      _
    %862 = vsyncpa [#allocation4], 1

</llo_original>
